<compile_context>
chip_gen: v7x
topology: tpu7x:2x2x1
jax: 0.10.0
libtpu: 0.0.40
codegen_flags: <defaults>
</compile_context>

<pallas_src>
import jax
import jax.numpy as jnp
import numpy as np
from jax.experimental import pallas as pl
from jax.experimental.pallas import tpu as pltpu

INTER = 7                      # inter_channels is hard-coded to 7 in the PyTorch module
_VMEM_LIMIT = 32 * 1024 * 1024  # raise the scoped VMEM limit (v5e default is 16 MiB)
_LANE = 128


def _fold_bn(w, b, gamma, beta, mean, var, eps=1e-5):
    """Fold eval-mode BatchNorm3d into a preceding 1x1x1 Conv3d.
    w: (Cin, Cout) laid out for x @ w, b: (Cout,)."""
    scale = gamma / jnp.sqrt(var + eps)
    return w * scale[None, :], (b - mean) * scale + beta


def _choose_tile(S, max_ts):
    """Pick a lane tile ts (multiple of 128) and padded spatial size Sp (ts | Sp)."""
    Sp = -(-S // _LANE) * _LANE
    for cand in (8192, 4096, 2048, 1024, 512, 256, 128):
        if cand <= max_ts and Sp % cand == 0:
            return cand, Sp
    return _LANE, Sp


# ---------------------------------------------------------------------------
# Kernel 1: global branch = AdaptiveAvgPool3d(1) + conv1x1 -> relu -> conv1x1
# (BN folded).  Accumulates lane-dense (C, ts) partial sums in VMEM scratch and
# only does the cross-lane reduce + tiny MLP + (B, C, 1) store at the last step.
# ---------------------------------------------------------------------------
def pool_global_mlp(x_bcs, true_s, w1t, b1c, w2t, b2c, ts):
    B, C, Sp = x_bcs.shape
    I = w1t.shape[0]
    n_s = Sp // ts
    inv_s = 1.0 / float(true_s)

    def kernel(x_ref, w1_ref, b1_ref, w2_ref, b2_ref, xg_ref, acc_ref):
        s = pl.program_id(1)

        @pl.when(s == 0)
        def _():
            acc_ref[...] = jnp.zeros_like(acc_ref)

        acc_ref[...] += x_ref[0].astype(jnp.float32)          # (C, ts) VPU add

        @pl.when(s == pl.num_programs(1) - 1)
        def _():
            # cross-lane reduce happens exactly once per batch element
            pooled = jnp.sum(acc_ref[...], axis=-1, keepdims=True) * inv_s   # (C, 1)
            # keep the tiny MLP lane-dense (N=128) instead of degenerate N=1 matmuls
            pooled_b = jnp.broadcast_to(pooled, (C, _LANE))                  # (C, 128)
            h = jnp.dot(w1_ref[...], pooled_b,
                        preferred_element_type=jnp.float32) + b1_ref[...]    # (I, 128)
            h = jnp.maximum(h, 0.0)
            xg = jnp.dot(w2_ref[...], h,
                         preferred_element_type=jnp.float32) + b2_ref[...]   # (C, 128)
            xg_ref[0] = xg[:, 0:1]                                           # (C, 1)

    return pl.pallas_call(
        kernel,
        out_shape=jax.ShapeDtypeStruct((B, C, 1), jnp.float32),
        grid=(B, n_s),
        in_specs=[
            pl.BlockSpec((1, C, ts), lambda b, s: (b, 0, s)),   # x tile (lane-dense)
            pl.BlockSpec((I, C), lambda b, s: (0, 0)),          # folded g_W1^T
            pl.BlockSpec((I, 1), lambda b, s: (0, 0)),          # folded g_b1 (col)
            pl.BlockSpec((C, I), lambda b, s: (0, 0)),          # folded g_W2^T
            pl.BlockSpec((C, 1), lambda b, s: (0, 0)),          # folded g_b2 (col)
        ],
        out_specs=pl.BlockSpec((1, C, 1), lambda b, s: (b, 0, 0)),
        scratch_shapes=[pltpu.VMEM((C, ts), jnp.float32)],
        compiler_params=pltpu.CompilerParams(
            dimension_semantics=("parallel", "arbitrary"),      # B parallel (2 TCs on v7x)
            vmem_limit_bytes=_VMEM_LIMIT),
    )(x_bcs, w1t, b1c, w2t, b2c)


# ---------------------------------------------------------------------------
# Kernel 2: local branch (conv1x1 -> relu -> conv1x1, BN folded, xg folded into
# the second bias), sigmoid gate, and rescale of the input — all channels-first.
# ---------------------------------------------------------------------------
def mscam_apply(x_bcs, bias2, w1t, b1c, w2t, ts):
    B, C, Sp = x_bcs.shape
    I = w1t.shape[0]

    def kernel(x_ref, b2_ref, w1_ref, b1_ref, w2_ref, o_ref):
        x = x_ref[0].astype(jnp.float32)                                   # (C, ts)
        h = jnp.dot(w1_ref[...], x, preferred_element_type=jnp.float32) + b1_ref[...]
        h = jnp.maximum(h, 0.0)                                            # (I, ts)
        xl = jnp.dot(w2_ref[...], h, preferred_element_type=jnp.float32) + b2_ref[0]
        wei = jax.nn.sigmoid(xl)                                           # (C, ts)
        o_ref[0] = (x * wei).astype(o_ref.dtype)                           # lane-dense store

    return pl.pallas_call(
        kernel,
        out_shape=jax.ShapeDtypeStruct((B, C, Sp), x_bcs.dtype),
        grid=(B, Sp // ts),
        in_specs=[
            pl.BlockSpec((1, C, ts), lambda b, s: (b, 0, s)),   # x tile
            pl.BlockSpec((1, C, 1), lambda b, s: (b, 0, 0)),    # per-batch (l_b2 + xg)
            pl.BlockSpec((I, C), lambda b, s: (0, 0)),          # folded l_W1^T
            pl.BlockSpec((I, 1), lambda b, s: (0, 0)),          # folded l_b1 (col)
            pl.BlockSpec((C, I), lambda b, s: (0, 0)),          # folded l_W2^T
        ],
        out_specs=pl.BlockSpec((1, C, ts), lambda b, s: (b, 0, s)),
        compiler_params=pltpu.CompilerParams(
            dimension_semantics=("parallel", "parallel"),
            vmem_limit_bytes=_VMEM_LIMIT),
    )(x_bcs, bias2, w1t, b1c, w2t)


# ---------------------------------------------------------------------------
# Parameter init (deterministic, synthetic) and full forward
# ---------------------------------------------------------------------------
def init_params(key, channels):
    ks = iter(jax.random.split(key, 24))

    def conv_bn(cin, cout):
        w = jax.random.normal(next(ks), (cin, cout), jnp.float32) / np.sqrt(cin)
        b = jax.random.normal(next(ks), (cout,), jnp.float32) * 0.1
        gamma = jax.random.uniform(next(ks), (cout,), jnp.float32, 0.5, 1.5)
        beta = jax.random.normal(next(ks), (cout,), jnp.float32) * 0.1
        mean = jax.random.normal(next(ks), (cout,), jnp.float32) * 0.1
        var = jax.random.uniform(next(ks), (cout,), jnp.float32, 0.5, 1.5)
        return _fold_bn(w, b, gamma, beta, mean, var)

    p = {}
    p["l_w1"], p["l_b1"] = conv_bn(channels, INTER)   # local: conv1+bn1
    p["l_w2"], p["l_b2"] = conv_bn(INTER, channels)   # local: conv2+bn2
    p["g_w1"], p["g_b1"] = conv_bn(channels, INTER)   # global: conv1+bn1
    p["g_w2"], p["g_b2"] = conv_bn(INTER, channels)   # global: conv2+bn2
    return p


def ms_cam_forward(x_ncdhw, p, max_ts=8192):
    B, C, D, H, W = x_ncdhw.shape
    S = D * H * W
    ts, Sp = _choose_tile(S, max_ts)

    # NCDHW already has the spatial axes last -> free reshape, no transpose.
    x_bcs = x_ncdhw.reshape(B, C, S)
    if Sp != S:  # ragged spatial size: zero-pad up to a lane-tile multiple
        x_bcs = jnp.pad(x_bcs, ((0, 0), (0, 0), (0, Sp - S)))

    # kernel-layout weights: (I, C)/(C, I) with column biases
    l_w1t, l_b1c = p["l_w1"].T, p["l_b1"][:, None]
    l_w2t = p["l_w2"].T
    g_w1t, g_b1c = p["g_w1"].T, p["g_b1"][:, None]
    g_w2t, g_b2c = p["g_w2"].T, p["g_b2"][:, None]

    # global branch: fused pool + MLP -> xg (B, C, 1)
    xg = pool_global_mlp(x_bcs, S, g_w1t, g_b1c, g_w2t, g_b2c, ts)

    # fold per-batch xg into the local branch's second bias (tiny glue op)
    bias2 = p["l_b2"][None, :, None] + xg                       # (B, C, 1)

    out = mscam_apply(x_bcs, bias2, l_w1t, l_b1c, l_w2t, ts)
    if Sp != S:
        out = out[:, :, :S]
    return out.reshape(B, C, D, H, W)


def ms_cam_reference(x_ncdhw, p):
    """Pure-JAX reference of the same (eval-mode BN) semantics."""
    B, C, D, H, W = x_ncdhw.shape
    x_bsc = jnp.transpose(x_ncdhw.reshape(B, C, -1), (0, 2, 1))
    xl = jnp.maximum(x_bsc @ p["l_w1"] + p["l_b1"], 0.0) @ p["l_w2"] + p["l_b2"]
    pooled = x_bsc.mean(axis=1)
    xg = jnp.maximum(pooled @ p["g_w1"] + p["g_b1"], 0.0) @ p["g_w2"] + p["g_b2"]
    wei = jax.nn.sigmoid(xl + xg[:, None, :])
    out = x_bsc * wei
    return jnp.transpose(out, (0, 2, 1)).reshape(B, C, D, H, W)


if __name__ == "__main__":
    key = jax.random.PRNGKey(0)
    kx1, kx2, kp = jax.random.split(key, 3)

    C = 8
    params = init_params(kp, C)

    fwd = jax.jit(ms_cam_forward)
    fwd_tiled = jax.jit(lambda x, p: ms_cam_forward(x, p, max_ts=128))

    # Test 1: S = 4*8*8 = 256 (lane-aligned); single-tile and multi-tile paths.
    x1 = jax.random.normal(kx1, (2, C, 4, 8, 8), jnp.float32)
    ref1 = ms_cam_reference(x1, params)
    out1 = fwd(x1, params)
    jax.block_until_ready(out1)
    np.testing.assert_allclose(np.asarray(out1), np.asarray(ref1), rtol=1e-5, atol=1e-5)
    out1b = fwd_tiled(x1, params)
    jax.block_until_ready(out1b)
    np.testing.assert_allclose(np.asarray(out1b), np.asarray(ref1), rtol=1e-5, atol=1e-5)

    # Test 2: S = 3*5*7 = 105 (ragged; exercises the zero-padding path).
    x2 = jax.random.normal(kx2, (2, C, 3, 5, 7), jnp.float32)
    ref2 = ms_cam_reference(x2, params)
    out2 = fwd(x2, params)
    jax.block_until_ready(out2)
    np.testing.assert_allclose(np.asarray(out2), np.asarray(ref2), rtol=1e-5, atol=1e-5)

    print("KERNEL_OK")
</pallas_src>

<mosaic_0001>
module attributes {stable_mosaic.version = 11 : i64} {
  func.func @kernel(%arg0: i32, %arg1: i32, %arg2: memref<1x8x256xf32, #tpu.memory_space<vmem>>, %arg3: memref<1x8x1xf32, #tpu.memory_space<vmem>>, %arg4: memref<7x8xf32, #tpu.memory_space<vmem>>, %arg5: memref<7x1xf32, #tpu.memory_space<vmem>>, %arg6: memref<8x7xf32, #tpu.memory_space<vmem>>, %arg7: memref<1x8x256xf32, #tpu.memory_space<vmem>>) attributes {dimension_semantics = [#tpu.dimension_semantics<parallel>, #tpu.dimension_semantics<parallel>], iteration_bounds = array<i64: 2, 1>, scalar_prefetch = 0 : i64, scratch_operands = 0 : i64, tpu.core_type = #tpu.core_type<tc>, window_params = [{transform_indices = @transform_0, window_bounds = array<i64: 1, 8, 256>}, {transform_indices = @transform_1, window_bounds = array<i64: 1, 8, 1>}, {pipeline_mode = #tpu.pipeline_mode<synchronous>, transform_indices = @transform_2, window_bounds = array<i64: 7, 8>}, {pipeline_mode = #tpu.pipeline_mode<synchronous>, transform_indices = @transform_3, window_bounds = array<i64: 7, 1>}, {pipeline_mode = #tpu.pipeline_mode<synchronous>, transform_indices = @transform_4, window_bounds = array<i64: 8, 7>}, {transform_indices = @transform_5, window_bounds = array<i64: 1, 8, 256>}]} {
    %c0 = arith.constant 0 : index
    %c0_0 = arith.constant 0 : index
    %c0_1 = arith.constant 0 : index
    %0 = vector.load %arg2[%c0, %c0_0, %c0_1] : memref<1x8x256xf32, #tpu.memory_space<vmem>>, vector<1x8x256xf32>
    %1 = vector.shape_cast %0 : vector<1x8x256xf32> to vector<8x256xf32>
    %c0_2 = arith.constant 0 : index
    %c0_3 = arith.constant 0 : index
    %2 = vector.load %arg4[%c0_2, %c0_3] : memref<7x8xf32, #tpu.memory_space<vmem>>, vector<7x8xf32>
    %cst = arith.constant dense<0.000000e+00> : vector<7x256xf32>
    %3 = tpu.matmul %2, %1, %cst {dimension_numbers = #tpu.dot_dimension_numbers<[1], [0], [0], [1], [0, 0, 1, 1], [], []>} : vector<7x8xf32>, vector<8x256xf32>, vector<7x256xf32> -> vector<7x256xf32>
    %c0_4 = arith.constant 0 : index
    %c0_5 = arith.constant 0 : index
    %4 = vector.load %arg5[%c0_4, %c0_5] : memref<7x1xf32, #tpu.memory_space<vmem>>, vector<7x1xf32>
    %5 = vector.broadcast %4 : vector<7x1xf32> to vector<7x256xf32>
    %6 = arith.addf %3, %5 : vector<7x256xf32>
    %cst_6 = arith.constant 0.000000e+00 : f32
    %7 = vector.broadcast %cst_6 : f32 to vector<7x256xf32>
    %8 = arith.maximumf %6, %7 : vector<7x256xf32>
    %c0_7 = arith.constant 0 : index
    %c0_8 = arith.constant 0 : index
    %9 = vector.load %arg6[%c0_7, %c0_8] : memref<8x7xf32, #tpu.memory_space<vmem>>, vector<8x7xf32>
    %cst_9 = arith.constant dense<0.000000e+00> : vector<8x256xf32>
    %10 = tpu.matmul %9, %8, %cst_9 {dimension_numbers = #tpu.dot_dimension_numbers<[1], [0], [0], [1], [0, 0, 1, 1], [], []>} : vector<8x7xf32>, vector<7x256xf32>, vector<8x256xf32> -> vector<8x256xf32>
    %c0_10 = arith.constant 0 : index
    %c0_11 = arith.constant 0 : index
    %c0_12 = arith.constant 0 : index
    %11 = vector.load %arg3[%c0_10, %c0_11, %c0_12] : memref<1x8x1xf32, #tpu.memory_space<vmem>>, vector<1x8x1xf32>
    %12 = vector.shape_cast %11 : vector<1x8x1xf32> to vector<8x1xf32>
    %13 = vector.broadcast %12 : vector<8x1xf32> to vector<8x256xf32>
    %14 = arith.addf %10, %13 : vector<8x256xf32>
    %15 = arith.negf %14 : vector<8x256xf32>
    %16 = math.exp %15 : vector<8x256xf32>
    %cst_13 = arith.constant 1.000000e+00 : f32
    %17 = vector.broadcast %cst_13 : f32 to vector<8x256xf32>
    %18 = arith.addf %17, %16 : vector<8x256xf32>
    %19 = arith.divf %17, %18 : vector<8x256xf32>
    %20 = arith.mulf %1, %19 : vector<8x256xf32>
    %c0_14 = arith.constant 0 : index
    %c0_15 = arith.constant 0 : index
    %c0_16 = arith.constant 0 : index
    %21 = vector.load %arg7[%c0_14, %c0_15, %c0_16] : memref<1x8x256xf32, #tpu.memory_space<vmem>>, vector<1x8x256xf32>
    %22 = vector.shape_cast %21 : vector<1x8x256xf32> to vector<8x256xf32>
    %23 = vector.shape_cast %20 : vector<8x256xf32> to vector<1x8x256xf32>
    tpu.vector_store %arg7[%c0_14, %c0_15, %c0_16], %23 {strides = array<i32>} : memref<1x8x256xf32, #tpu.memory_space<vmem>>, vector<1x8x256xf32>,
    return
  }
  func.func @transform_0(%arg0: i32, %arg1: i32) -> (i32, i32, i32) {
    %c0_i32 = arith.constant 0 : i32
    %c0_i32_0 = arith.constant 0 : i32
    return %arg0, %c0_i32, %arg1 : i32, i32, i32
  }
  func.func @transform_1(%arg0: i32, %arg1: i32) -> (i32, i32, i32) {
    %c0_i32 = arith.constant 0 : i32
    %c0_i32_0 = arith.constant 0 : i32
    %c0_i32_1 = arith.constant 0 : i32
    return %arg0, %c0_i32, %c0_i32_0 : i32, i32, i32
  }
  func.func @transform_2(%arg0: i32, %arg1: i32) -> (i32, i32) {
    %c0_i32 = arith.constant 0 : i32
    %c0_i32_0 = arith.constant 0 : i32
    %c0_i32_1 = arith.constant 0 : i32
    return %c0_i32, %c0_i32_0 : i32, i32
  }
  func.func @transform_3(%arg0: i32, %arg1: i32) -> (i32, i32) {
    %c0_i32 = arith.constant 0 : i32
    %c0_i32_0 = arith.constant 0 : i32
    %c0_i32_1 = arith.constant 0 : i32
    return %c0_i32, %c0_i32_0 : i32, i32
  }
  func.func @transform_4(%arg0: i32, %arg1: i32) -> (i32, i32) {
    %c0_i32 = arith.constant 0 : i32
    %c0_i32_0 = arith.constant 0 : i32
    %c0_i32_1 = arith.constant 0 : i32
    return %c0_i32, %c0_i32_0 : i32, i32
  }
  func.func @transform_5(%arg0: i32, %arg1: i32) -> (i32, i32, i32) {
    %c0_i32 = arith.constant 0 : i32
    %c0_i32_0 = arith.constant 0 : i32
    return %arg0, %c0_i32, %arg1 : i32, i32, i32
  }
}

module attributes {stable_mosaic.version = 11 : i64} {
  func.func @kernel(%arg0: i32, %arg1: i32, %arg2: memref<1x8x256xf32, #tpu.memory_space<vmem>>, %arg3: memref<7x8xf32, #tpu.memory_space<vmem>>, %arg4: memref<7x1xf32, #tpu.memory_space<vmem>>, %arg5: memref<8x7xf32, #tpu.memory_space<vmem>>, %arg6: memref<8x1xf32, #tpu.memory_space<vmem>>, %arg7: memref<1x8x1xf32, #tpu.memory_space<vmem>>, %arg8: memref<8x256xf32, #tpu.memory_space<vmem>>) attributes {dimension_semantics = [#tpu.dimension_semantics<parallel>, #tpu.dimension_semantics<arbitrary>], iteration_bounds = array<i64: 2, 1>, scalar_prefetch = 0 : i64, scratch_operands = 1 : i64, tpu.core_type = #tpu.core_type<tc>, window_params = [{transform_indices = @transform_0, window_bounds = array<i64: 1, 8, 256>}, {pipeline_mode = #tpu.pipeline_mode<synchronous>, transform_indices = @transform_1, window_bounds = array<i64: 7, 8>}, {pipeline_mode = #tpu.pipeline_mode<synchronous>, transform_indices = @transform_2, window_bounds = array<i64: 7, 1>}, {pipeline_mode = #tpu.pipeline_mode<synchronous>, transform_indices = @transform_3, window_bounds = array<i64: 8, 7>}, {pipeline_mode = #tpu.pipeline_mode<synchronous>, transform_indices = @transform_4, window_bounds = array<i64: 8, 1>}, {transform_indices = @transform_5, window_bounds = array<i64: 1, 8, 1>}]} {
    %c0_i32 = arith.constant 0 : i32
    %0 = arith.cmpi eq, %arg1, %c0_i32 : i32
    %1 = arith.extui %0 : i1 to i32
    %c0_i32_0 = arith.constant 0 : i32
    %2 = arith.cmpi ne, %1, %c0_i32_0 : i32
    scf.if %2 {
      %cst = arith.constant 0.000000e+00 : f32
      %11 = vector.broadcast %cst : f32 to vector<8x256xf32>
      %c0_9 = arith.constant 0 : index
      %c0_10 = arith.constant 0 : index
      %12 = vector.load %arg8[%c0_9, %c0_10] : memref<8x256xf32, #tpu.memory_space<vmem>>, vector<8x256xf32>
      tpu.vector_store %arg8[%c0_9, %c0_10], %11 {strides = array<i32>} : memref<8x256xf32, #tpu.memory_space<vmem>>, vector<8x256xf32>,
    } else {
    }
    %c0 = arith.constant 0 : index
    %c0_1 = arith.constant 0 : index
    %3 = vector.load %arg8[%c0, %c0_1] : memref<8x256xf32, #tpu.memory_space<vmem>>, vector<8x256xf32>
    %c0_2 = arith.constant 0 : index
    %c0_3 = arith.constant 0 : index
    %c0_4 = arith.constant 0 : index
    %4 = vector.load %arg2[%c0_2, %c0_3, %c0_4] : memref<1x8x256xf32, #tpu.memory_space<vmem>>, vector<1x8x256xf32>
    %5 = vector.shape_cast %4 : vector<1x8x256xf32> to vector<8x256xf32>
    %6 = arith.addf %3, %5 : vector<8x256xf32>
    %c0_5 = arith.constant 0 : index
    %c0_6 = arith.constant 0 : index
    %7 = vector.load %arg8[%c0_5, %c0_6] : memref<8x256xf32, #tpu.memory_space<vmem>>, vector<8x256xf32>
    tpu.vector_store %arg8[%c0_5, %c0_6], %6 {strides = array<i32>} : memref<8x256xf32, #tpu.memory_space<vmem>>, vector<8x256xf32>,
    %c0_i32_7 = arith.constant 0 : i32
    %8 = arith.cmpi eq, %arg1, %c0_i32_7 : i32
    %9 = arith.extui %8 : i1 to i32
    %c0_i32_8 = arith.constant 0 : i32
    %10 = arith.cmpi ne, %9, %c0_i32_8 : i32
    scf.if %10 {
      %c0_9 = arith.constant 0 : index
      %c0_10 = arith.constant 0 : index
      %11 = vector.load %arg8[%c0_9, %c0_10] : memref<8x256xf32, #tpu.memory_space<vmem>>, vector<8x256xf32>
      %cst = arith.constant dense<0.000000e+00> : vector<8xf32>
      %12 = vector.multi_reduction <add>, %11, %cst [1] : vector<8x256xf32> to vector<8xf32>
      %13 = vector.shape_cast %12 : vector<8xf32> to vector<8x1xf32>
      %cst_11 = arith.constant 3.906250e-03 : f32
      %14 = vector.broadcast %cst_11 : f32 to vector<8x1xf32>
      %15 = arith.mulf %13, %14 : vector<8x1xf32>
      %16 = vector.shape_cast %15 : vector<8x1xf32> to vector<8x1xf32>
      %17 = vector.broadcast %16 : vector<8x1xf32> to vector<8x128xf32>
      %c0_12 = arith.constant 0 : index
      %c0_13 = arith.constant 0 : index
      %18 = vector.load %arg3[%c0_12, %c0_13] : memref<7x8xf32, #tpu.memory_space<vmem>>, vector<7x8xf32>
      %cst_14 = arith.constant dense<0.000000e+00> : vector<7x128xf32>
      %19 = tpu.matmul %18, %17, %cst_14 {dimension_numbers = #tpu.dot_dimension_numbers<[1], [0], [0], [1], [0, 0, 1, 1], [], []>} : vector<7x8xf32>, vector<8x128xf32>, vector<7x128xf32> -> vector<7x128xf32>
      %c0_15 = arith.constant 0 : index
      %c0_16 = arith.constant 0 : index
      %20 = vector.load %arg4[%c0_15, %c0_16] : memref<7x1xf32, #tpu.memory_space<vmem>>, vector<7x1xf32>
      %21 = vector.broadcast %20 : vector<7x1xf32> to vector<7x128xf32>
      %22 = arith.addf %19, %21 : vector<7x128xf32>
      %cst_17 = arith.constant 0.000000e+00 : f32
      %23 = vector.broadcast %cst_17 : f32 to vector<7x128xf32>
      %24 = arith.maximumf %22, %23 : vector<7x128xf32>
      %c0_18 = arith.constant 0 : index
      %c0_19 = arith.constant 0 : index
      %25 = vector.load %arg5[%c0_18, %c0_19] : memref<8x7xf32, #tpu.memory_space<vmem>>, vector<8x7xf32>
      %cst_20 = arith.constant dense<0.000000e+00> : vector<8x128xf32>
      %26 = tpu.matmul %25, %24, %cst_20 {dimension_numbers = #tpu.dot_dimension_numbers<[1], [0], [0], [1], [0, 0, 1, 1], [], []>} : vector<8x7xf32>, vector<7x128xf32>, vector<8x128xf32> -> vector<8x128xf32>
      %c0_21 = arith.constant 0 : index
      %c0_22 = arith.constant 0 : index
      %27 = vector.load %arg6[%c0_21, %c0_22] : memref<8x1xf32, #tpu.memory_space<vmem>>, vector<8x1xf32>
      %28 = vector.broadcast %27 : vector<8x1xf32> to vector<8x128xf32>
      %29 = arith.addf %26, %28 : vector<8x128xf32>
      %30 = vector.extract_strided_slice %29 {offsets = [0, 0], sizes = [8, 1], strides = [1, 1]} : vector<8x128xf32> to vector<8x1xf32>
      %c0_23 = arith.constant 0 : index
      %c0_24 = arith.constant 0 : index
      %c0_25 = arith.constant 0 : index
      %31 = vector.load %arg7[%c0_23, %c0_24, %c0_25] : memref<1x8x1xf32, #tpu.memory_space<vmem>>, vector<1x8x1xf32>
      %32 = vector.shape_cast %31 : vector<1x8x1xf32> to vector<8x1xf32>
      %33 = vector.shape_cast %30 : vector<8x1xf32> to vector<1x8x1xf32>
      tpu.vector_store %arg7[%c0_23, %c0_24, %c0_25], %33 {strides = array<i32>} : memref<1x8x1xf32, #tpu.memory_space<vmem>>, vector<1x8x1xf32>,
    } else {
    }
    return
  }
  func.func @transform_0(%arg0: i32, %arg1: i32) -> (i32, i32, i32) {
    %c0_i32 = arith.constant 0 : i32
    %c0_i32_0 = arith.constant 0 : i32
    return %arg0, %c0_i32, %arg1 : i32, i32, i32
  }
  func.func @transform_1(%arg0: i32, %arg1: i32) -> (i32, i32) {
    %c0_i32 = arith.constant 0 : i32
    %c0_i32_0 = arith.constant 0 : i32
    %c0_i32_1 = arith.constant 0 : i32
    return %c0_i32, %c0_i32_0 : i32, i32
  }
  func.func @transform_2(%arg0: i32, %arg1: i32) -> (i32, i32) {
    %c0_i32 = arith.constant 0 : i32
    %c0_i32_0 = arith.constant 0 : i32
    %c0_i32_1 = arith.constant 0 : i32
    return %c0_i32, %c0_i32_0 : i32, i32
  }
  func.func @transform_3(%arg0: i32, %arg1: i32) -> (i32, i32) {
    %c0_i32 = arith.constant 0 : i32
    %c0_i32_0 = arith.constant 0 : i32
    %c0_i32_1 = arith.constant 0 : i32
    return %c0_i32, %c0_i32_0 : i32, i32
  }
  func.func @transform_4(%arg0: i32, %arg1: i32) -> (i32, i32) {
    %c0_i32 = arith.constant 0 : i32
    %c0_i32_0 = arith.constant 0 : i32
    %c0_i32_1 = arith.constant 0 : i32
    return %c0_i32, %c0_i32_0 : i32, i32
  }
  func.func @transform_5(%arg0: i32, %arg1: i32) -> (i32, i32, i32) {
    %c0_i32 = arith.constant 0 : i32
    %c0_i32_0 = arith.constant 0 : i32
    %c0_i32_1 = arith.constant 0 : i32
    return %arg0, %c0_i32, %c0_i32_0 : i32, i32, i32
  }
}

</mosaic_0001>

<llo_original>
// kernel: ms_cam_forward.2
$region0: #{ms_cam_forward.2}
  #allocation0 [shape = 'u32[]', space=smem, size = 0x4, offset = 0x4, fixed_abs, tag = 'smem constant byte address 0x4 - core index']
  #allocation1 [shape = 'u32[144,128]{1,0:T(1,128)}', space=vmem, size = 0x12000, scoped, tag = 'internal scratch']
  #allocation2 [shape = 'f32[8,256]{1,0:T(8,128)}', space=vmem, size = 0x2000, scoped, tag = 'scratch operand']
  %s0 = inlined_call_operand.vmem [shape: f32[2,8,256], index: 0, kind: input, shape index: {}]
  %s1 = inlined_call_operand.vmem [shape: f32[7,8], index: 1, kind: input, shape index: {}]
  %s2 = inlined_call_operand.vmem [shape: f32[7,1], index: 2, kind: input, shape index: {}]
  %s3 = inlined_call_operand.vmem [shape: f32[8,7], index: 3, kind: input, shape index: {}]
  %s4 = inlined_call_operand.vmem [shape: f32[8,1], index: 4, kind: input, shape index: {}]
  %s5 = inlined_call_operand.vmem [shape: f32[2,8,1], index: 5, kind: output, shape index: {}]
  %s6 = sld [smem:[#allocation0]]
  $region61: #{ms_cam_forward.2} parent=0
    _
  %s8 = ssub.s32 1, %s6
  %s9 = scalar_select 0, %s8, %s6
  loop: start=0, step=1, limit=4
  $region2: #{ms_cam_forward.2} parent=0 // loop_pre_header
    _
  $region3: #{ms_cam_forward.2} parent=0 // loop_header
    %s11 = sphi 0, %s15
    %p12 = scmp.ge.s32.totalorder %s11, 4
    %s18 = sphi 0, %s30
    %s19 = sphi 0, %s26
    %s20 = sphi 0, %s18
    %s21 = sphi 0, %s19
    %s22 = sphi 0, %s20
    %s23 = sphi 0, %s21
    %s35 = sphi 0, %s37
    %s38 = sphi 0, %s35
    %s39 = sphi 0, %s38
    %s55 = sphi 0, %s39
    %s59 = sphi 0, %s59
    %s61 = sphi 0, %s59
    %s62 = sphi 0, %s61
    %s76 = sphi 0, %s62
    %s80 = sphi 0, %s80
    %s82 = sphi 0, %s80
    %s83 = sphi 0, %s82
    %s97 = sphi 0, %s83
    %s101 = sphi 0, %s101
    %s103 = sphi 0, %s101
    %s104 = sphi 0, %s103
    %s118 = sphi 0, %s104
    %s122 = sphi 0, %s122
    %s124 = sphi 0, %s122
    %s125 = sphi 0, %s124
    %s139 = sphi 0, %s125
    %s145 = sphi 0, %s147
    %s148 = sphi 0, %s145
    %s149 = sphi 0, %s148
    %s165 = sphi 0, %s149
  $region4: #{ms_cam_forward.2} parent=0 // loop_header_branch
    %14 = sbr.rel (%p12) target = $region8
  $region5: #{ms_cam_forward.2} parent=0 // loop_body
    %s16 = ssub.s32 %s11, 1
    %s17 = ssub.s32 %s11, 2
    %s24 = sadd.s32 1, %s19
    %p25 = scmp.ge.s32.totalorder %s24, 1
    %s26 = scalar_select %p25, 0, %s24
    %s27 = sadd.s32 1, %s18
    %s28 = scalar_select %p25, %s27, %s18
    %p29 = scmp.ge.s32.totalorder %s28, 2
    %s30 = scalar_select %p29, 0, %s28
    %s31 = ssub.s32 %s18, %s30
    %s32 = ssub.s32 %s19, %s26
    %s33 = sor.u32 %s31, %s32
    %p34 = scmp.eq.s32.totalorder %s33, 0
    %s36 = sadd.s32 %s35, 1
    %s37 = scalar_select %p34, %s35, %s36
    %p40 = pneg %p34
    %p41 = scmp.eq.s32.totalorder %s11, 1
    %p42 = por %p40, %p41
    %p43 = scmp.ne.s32.totalorder %s35, %s38
    %p44 = scmp.eq.s32.totalorder %s11, 0
    %p45 = por %p43, %p44
    %p46 = scmp.ne.s32.totalorder %s35, %s38
    %p47 = scmp.eq.s32.totalorder %s16, 1
    %p48 = por %p46, %p47
    %p49 = scmp.ne.s32.totalorder %s38, %s39
    %p50 = scmp.eq.s32.totalorder %s16, 0
    %p51 = por %p49, %p50
    %p52 = scmp.ne.s32.totalorder %s38, %s39
    %p53 = scmp.eq.s32.totalorder %s17, 1
    %p54 = por %p52, %p53
    %p56 = scmp.ne.s32.totalorder %s39, %s55
    %p57 = scmp.eq.s32.totalorder %s17, 0
    %p58 = por %p56, %p57
    %s60 = sadd.s32 %s59, 1
    %p63 = scmp.eq.s32.totalorder %s11, 1
    %p64 = scmp.ne.s32.totalorder %s59, %s61
    %p65 = scmp.eq.s32.totalorder %s11, 0
    %p66 = por %p64, %p65
    %p67 = scmp.ne.s32.totalorder %s59, %s61
    %p68 = scmp.eq.s32.totalorder %s16, 1
    %p69 = por %p67, %p68
    %p70 = scmp.ne.s32.totalorder %s61, %s62
    %p71 = scmp.eq.s32.totalorder %s16, 0
    %p72 = por %p70, %p71
    %p73 = scmp.ne.s32.totalorder %s61, %s62
    %p74 = scmp.eq.s32.totalorder %s17, 1
    %p75 = por %p73, %p74
    %p77 = scmp.ne.s32.totalorder %s62, %s76
    %p78 = scmp.eq.s32.totalorder %s17, 0
    %p79 = por %p77, %p78
    %s81 = sadd.s32 %s80, 1
    %p84 = scmp.eq.s32.totalorder %s11, 1
    %p85 = scmp.ne.s32.totalorder %s80, %s82
    %p86 = scmp.eq.s32.totalorder %s11, 0
    %p87 = por %p85, %p86
    %p88 = scmp.ne.s32.totalorder %s80, %s82
    %p89 = scmp.eq.s32.totalorder %s16, 1
    %p90 = por %p88, %p89
    %p91 = scmp.ne.s32.totalorder %s82, %s83
    %p92 = scmp.eq.s32.totalorder %s16, 0
    %p93 = por %p91, %p92
    %p94 = scmp.ne.s32.totalorder %s82, %s83
    %p95 = scmp.eq.s32.totalorder %s17, 1
    %p96 = por %p94, %p95
    %p98 = scmp.ne.s32.totalorder %s83, %s97
    %p99 = scmp.eq.s32.totalorder %s17, 0
    %p100 = por %p98, %p99
    %s102 = sadd.s32 %s101, 1
    %p105 = scmp.eq.s32.totalorder %s11, 1
    %p106 = scmp.ne.s32.totalorder %s101, %s103
    %p107 = scmp.eq.s32.totalorder %s11, 0
    %p108 = por %p106, %p107
    %p109 = scmp.ne.s32.totalorder %s101, %s103
    %p110 = scmp.eq.s32.totalorder %s16, 1
    %p111 = por %p109, %p110
    %p112 = scmp.ne.s32.totalorder %s103, %s104
    %p113 = scmp.eq.s32.totalorder %s16, 0
    %p114 = por %p112, %p113
    %p115 = scmp.ne.s32.totalorder %s103, %s104
    %p116 = scmp.eq.s32.totalorder %s17, 1
    %p117 = por %p115, %p116
    %p119 = scmp.ne.s32.totalorder %s104, %s118
    %p120 = scmp.eq.s32.totalorder %s17, 0
    %p121 = por %p119, %p120
    %s123 = sadd.s32 %s122, 1
    %p126 = scmp.eq.s32.totalorder %s11, 1
    %p127 = scmp.ne.s32.totalorder %s122, %s124
    %p128 = scmp.eq.s32.totalorder %s11, 0
    %p129 = por %p127, %p128
    %p130 = scmp.ne.s32.totalorder %s122, %s124
    %p131 = scmp.eq.s32.totalorder %s16, 1
    %p132 = por %p130, %p131
    %p133 = scmp.ne.s32.totalorder %s124, %s125
    %p134 = scmp.eq.s32.totalorder %s16, 0
    %p135 = por %p133, %p134
    %p136 = scmp.ne.s32.totalorder %s124, %s125
    %p137 = scmp.eq.s32.totalorder %s17, 1
    %p138 = por %p136, %p137
    %p140 = scmp.ne.s32.totalorder %s125, %s139
    %p141 = scmp.eq.s32.totalorder %s17, 0
    %p142 = por %p140, %p141
    %s143 = ssub.s32 %s18, %s30
    %p144 = scmp.eq.s32.totalorder %s143, 0
    %s146 = sadd.s32 %s145, 1
    %s147 = scalar_select %p144, %s145, %s146
    %p150 = pneg %p144
    %p151 = scmp.eq.s32.totalorder %s11, 1
    %p152 = por %p150, %p151
    %p153 = scmp.ne.s32.totalorder %s145, %s148
    %p154 = scmp.eq.s32.totalorder %s11, 0
    %p155 = por %p153, %p154
    %p156 = scmp.ne.s32.totalorder %s145, %s148
    %p157 = scmp.eq.s32.totalorder %s16, 1
    %p158 = por %p156, %p157
    %p159 = scmp.ne.s32.totalorder %s148, %s149
    %p160 = scmp.eq.s32.totalorder %s16, 0
    %p161 = por %p159, %p160
    %p162 = scmp.ne.s32.totalorder %s148, %s149
    %p163 = scmp.eq.s32.totalorder %s17, 1
    %p164 = por %p162, %p163
    %p166 = scmp.ne.s32.totalorder %s149, %s165
    %p167 = scmp.eq.s32.totalorder %s17, 0
    %p168 = por %p166, %p167
    %p169 = scmp.le.s32.totalorder 1, %s11
    %p170 = scmp.lt.s32.totalorder %s11, 3
    %p171 = pnand %p169, %p170
    %p172 = pneg %p171
    // Predicated region
    $region9: #{ms_cam_forward.2} parent=5 // pred_check
      _
    $region10: #{ms_cam_forward.2} parent=5 // pred_check_branch
      %174 = sbr.rel (%p171) target = $region12
    $region11: #{ms_cam_forward.2} parent=5 // pred_region
      %s175 = ssub.s32 %s11, 1
      // Predicated region
      $region13: #{ms_cam_forward.2} parent=11 // pred_check
        %p176 = pneg %p72
      $region14: #{ms_cam_forward.2} parent=11 // pred_check_branch
        %178 = sbr.rel (%p176) target = $region16
      $region15: #{ms_cam_forward.2} parent=11 // pred_region
        _
      $region16: #{ms_cam_forward.2} parent=11 // pred_fallthru
        _
      // Predicated region
      $region17: #{ms_cam_forward.2} parent=11 // pred_check
        %p179 = pneg %p93
      $region18: #{ms_cam_forward.2} parent=11 // pred_check_branch
        %181 = sbr.rel (%p179) target = $region20
      $region19: #{ms_cam_forward.2} parent=11 // pred_region
        _
      $region20: #{ms_cam_forward.2} parent=11 // pred_fallthru
        _
      // Predicated region
      $region21: #{ms_cam_forward.2} parent=11 // pred_check
        %p182 = pneg %p114
      $region22: #{ms_cam_forward.2} parent=11 // pred_check_branch
        %184 = sbr.rel (%p182) target = $region24
      $region23: #{ms_cam_forward.2} parent=11 // pred_region
        _
      $region24: #{ms_cam_forward.2} parent=11 // pred_fallthru
        _
      // Predicated region
      $region25: #{ms_cam_forward.2} parent=11 // pred_check
        %p185 = pneg %p135
      $region26: #{ms_cam_forward.2} parent=11 // pred_check_branch
        %187 = sbr.rel (%p185) target = $region28
      $region27: #{ms_cam_forward.2} parent=11 // pred_region
        _
      $region28: #{ms_cam_forward.2} parent=11 // pred_fallthru
        _
    $region12: #{ms_cam_forward.2} parent=5 // pred_fallthru
      _
    %p188 = scmp.lt.s32.totalorder %s11, 2
    // Predicated region
    $region29: #{ms_cam_forward.2} parent=5 // pred_check
      %p189 = pneg %p188
    $region30: #{ms_cam_forward.2} parent=5 // pred_check_branch
      %191 = sbr.rel (%p189) target = $region32
    $region31: #{ms_cam_forward.2} parent=5 // pred_region
      // Predicated region
      $region33: #{ms_cam_forward.2} parent=31 // pred_check
        %p192 = pneg %p45
      $region34: #{ms_cam_forward.2} parent=31 // pred_check_branch
        %194 = sbr.rel (%p192) target = $region36
      $region35: #{ms_cam_forward.2} parent=31 // pred_region
        %s195 = smul.u32 2, %s19
        %p196 = scmp.lt.s32.totalorder %s18, 1
        %s197 = scalar_select %p196, %s18, 1
        %p198 = scmp.lt.s32.totalorder %s195, 1
        %s199 = scalar_select %p198, %s195, 1
        %s200 = smul.addr %s197, 2
        %s201 = sadd.s32 %s199, %s200
        %s202 = smul.addr %s201, 8
        %s203 = scalar_lea.vmem %s0, %s202
        %s204 = smul.u32 2, %s19
      $region36: #{ms_cam_forward.2} parent=31 // pred_fallthru
        _
    $region32: #{ms_cam_forward.2} parent=5 // pred_fallthru
      _
    %p205 = scmp.le.s32.totalorder 1, %s11
    %p206 = scmp.lt.s32.totalorder %s11, 3
    %p207 = pnand %p205, %p206
    %p208 = pneg %p207
    // Predicated region
    $region37: #{ms_cam_forward.2} parent=5 // pred_check
      _
    $region38: #{ms_cam_forward.2} parent=5 // pred_check_branch
      %210 = sbr.rel (%p207) target = $region40
    $region39: #{ms_cam_forward.2} parent=5 // pred_region
      %s211 = ssub.s32 %s11, 1
      %s212 = smul.u32 2, %s21
      %p213 = scmp.lt.s32.totalorder %s20, 1
      %s214 = scalar_select %p213, %s20, 1
      %p215 = scmp.lt.s32.totalorder %s212, 1
      %s216 = scalar_select %p215, %s212, 1
      %s217 = smul.addr %s214, 2
      %s218 = sadd.s32 %s216, %s217
      %s219 = smul.addr %s218, 8
      %s220 = scalar_lea.vmem %s0, %s219
      %p221 = pneg %p51
      %p222 = pneg %p48
      %p223 = pneg %p72
      %p224 = pneg %p69
      %p225 = pneg %p93
      %p226 = pneg %p90
      %p227 = pneg %p114
      %p228 = pneg %p111
      %p229 = pneg %p135
      %p230 = pneg %p132
      %p231 = pneg %p161
      %p232 = pneg %p158
      %p233 = scmp.lt.s32.totalorder %s20, 1
      %s234 = scalar_select %p233, %s20, 1
      %s235 = smul.addr %s234, 8
      %s236 = scalar_lea.vmem %s5, %s235
      %s237 = smul.u32 2, %s21
      %p238 = scmp.lt.s32.totalorder %s20, 1
      %s239 = scalar_select %p238, %s20, 1
      %p240 = scmp.lt.s32.totalorder %s237, 1
      %s241 = scalar_select %p240, %s237, 1
      %s242 = smul.addr %s239, 2
      %s243 = sadd.s32 %s241, %s242
      %s244 = smul.addr %s243, 8
      %s245 = scalar_lea.vmem %s0, %s244
      %s246 = smul.u32 2, %s21
      %p247 = scmp.lt.s32.totalorder %s20, 1
      %s248 = scalar_select %p247, %s20, 1
      %s249 = smul.addr %s248, 8
      %s250 = scalar_lea.vmem %s5, %s249
      %p251 = scmp.eq.s32.totalorder %s21, 0
      // Predicated region
      $region41: #{ms_cam_forward.2} parent=39 // pred_check
        %p252 = pneg %p251
      $region42: #{ms_cam_forward.2} parent=39 // pred_check_branch
        %254 = sbr.rel (%p252) target = $region44
      $region43: #{ms_cam_forward.2} parent=39 // pred_region
        %255 = vst [vmem:[#allocation2] sm:$0xff] 0.0
        %256 = vst [vmem:[#allocation2 + $0x8] sm:$0xff] 0.0
      $region44: #{ms_cam_forward.2} parent=39 // pred_fallthru
        _
      %v257 = vld [vmem:[#allocation2] sm:$0xff]
      %v258 = vld [vmem:[#allocation2 + $0x8] sm:$0xff]
      %v259 = vld [vmem:[%s245] sm:$0xff]
      %v260 = vld [vmem:[%s245 + $0x8] sm:$0xff]
      %v261 = vadd.f32 %v257, %v259
      %v262 = vadd.f32 %v258, %v260
      %263 = vst [vmem:[#allocation2] sm:$0xff] %v261
      %264 = vst [vmem:[#allocation2 + $0x8] sm:$0xff] %v262
      // Predicated region
      $region45: #{ms_cam_forward.2} parent=39 // pred_check
        %p265 = pneg %p251
      $region46: #{ms_cam_forward.2} parent=39 // pred_check_branch
        %267 = sbr.rel (%p265) target = $region48
      $region47: #{ms_cam_forward.2} parent=39 // pred_region
        %v268 = vld [vmem:[#allocation2] sm:$0xff]
        %v269 = vld [vmem:[#allocation2 + $0x8] sm:$0xff]
        %v270 = vadd.f32 %v268, %v269
        %271 = vadd.xlane.f32.xlu0 %v270
        %v272 = vpop.xlane.xlu0 %271
        %v273 = vmul.f32 %v272, 0.00390625
        %v274 = vld [vmem:[%s1] sm:$0x7f]
        %v275 = vld [vmem:[%s2] sm:$0x7f]
        %277 = vset.pattern.permute.xlu0 0
        %278 = vperm.xlu0 %277, %v275
        %v279 = vpop.permute.xlu0 %278
        %vm281 = vcmask 64512
        %v283 = vsel %vm281, %v274, 0
        %285 = vmatprep.subr.mxu0 0.0
        %286 = vmatpush1.msra.mxu0 %v273
        %287 = vmatprep.subr.mxu0 0.0
        %288 = vmatpush1.msra.mxu0 0.0
        %289 = vmatprep.subr.mxu0 0.0
        %290 = vmatpush1.msra.mxu0 0.0
        %291 = vmatprep.subr.mxu0 0.0
        %292 = vmatpush1.msra.mxu0 0.0
        %293 = vmatprep.subr.mxu0 0.0
        %294 = vmatpush1.msra.mxu0 0.0
        %295 = vmatprep.subr.mxu0 0.0
        %296 = vmatpush1.msra.mxu0 0.0
        %297 = vmatprep.subr.mxu0 0.0
        %298 = vmatpush1.msra.mxu0 0.0
        %299 = vmatprep.subr.mxu0 0.0
        %300 = vmatpush1.msra.mxu0 0.0
        %301 = vmatprep.subr.mxu0 0.0
        %302 = vmatpush1.msra.mxu0 0.0
        %303 = vmatprep.subr.mxu0 0.0
        %304 = vmatpush1.msra.mxu0 0.0
        %305 = vmatprep.subr.mxu0 0.0
        %306 = vmatpush1.msra.mxu0 0.0
        %307 = vmatprep.subr.mxu0 0.0
        %308 = vmatpush1.msra.mxu0 0.0
        %309 = vmatprep.subr.mxu0 0.0
        %310 = vmatpush1.msra.mxu0 0.0
        %311 = vmatprep.subr.mxu0 0.0
        %312 = vmatpush1.msra.mxu0 0.0
        %313 = vmatprep.subr.mxu0 0.0
        %314 = vmatpush1.msra.mxu0 0.0
        %315 = vmatprep.subr.mxu0 0.0
        %316 = vmatpush1.msra.mxu0 0.0
        %317 = vmatprep.subr.mxu0 0.0
        %318 = vmatpush1.msra.mxu0 0.0
        %319 = vmatprep.subr.mxu0 0.0
        %320 = vmatpush1.msra.mxu0 0.0
        %321 = vmatprep.subr.mxu0 0.0
        %322 = vmatpush1.msra.mxu0 0.0
        %323 = vmatprep.subr.mxu0 0.0
        %324 = vmatpush1.msra.mxu0 0.0
        %325 = vmatprep.subr.mxu0 0.0
        %326 = vmatpush1.msra.mxu0 0.0
        %327 = vmatprep.subr.mxu0 0.0
        %328 = vmatpush1.msra.mxu0 0.0
        %329 = vmatprep.subr.mxu0 0.0
        %330 = vmatpush1.msra.mxu0 0.0
        %331 = vmatprep.subr.mxu0 0.0
        %332 = vmatpush1.msra.mxu0 0.0
        %333 = vmatprep.subr.mxu0 0.0
        %334 = vmatpush1.msra.mxu0 0.0
        %335 = vmatprep.subr.mxu0 0.0
        %336 = vmatpush1.msra.mxu0 0.0
        %337 = vmatprep.subr.mxu0 0.0
        %338 = vmatpush1.msra.mxu0 0.0
        %339 = vmatprep.subr.mxu0 0.0
        %340 = vmatpush1.msra.mxu0 0.0
        %341 = vmatprep.subr.mxu0 0.0
        %342 = vmatpush1.msra.mxu0 0.0
        %343 = vmatprep.subr.mxu0 0.0
        %344 = vmatpush1.msra.mxu0 0.0
        %345 = vmatprep.subr.mxu0 0.0
        %346 = vmatpush1.msra.mxu0 0.0
        %347 = vmatprep.subr.mxu0 0.0
        %348 = vmatpush1.msra.mxu0 0.0
        %349 = vmatprep.mubr.f32.mxu0 0.0
        %350 = vmatmul.mubr.f32.gmra.mrb[0].mxu0 %v283
        %v351 = vpop.f32.mrb[0].mxu0
        %v352 = vadd.f32 %v279, %v351
        %v353 = vpop.f32.mrb[0].mxu0
        %354 = vdwg.mxu0
        %v355 = vmax.f32 %v352, 0.0
        %v356 = vld [vmem:[%s3] sm:$0xff]
        %v357 = vld [vmem:[%s4] sm:$0xff]
        %359 = vset.pattern.permute.xlu0 0
        %360 = vperm.xlu0 %359, %v357
        %v361 = vpop.permute.xlu0 %360
        %vm363 = vcmask 56320
        %v365 = vsel %vm363, %v356, 0
        %vm367 = vcmask 1046528
        %v369 = vsel %vm367, %v355, 0
        %371 = vmatprep.subr.mxu0 0.0
        %372 = vmatpush1.msra.mxu0 %v369
        %373 = vmatprep.subr.mxu0 0.0
        %374 = vmatpush1.msra.mxu0 0.0
        %375 = vmatprep.subr.mxu0 0.0
        %376 = vmatpush1.msra.mxu0 0.0
        %377 = vmatprep.subr.mxu0 0.0
        %378 = vmatpush1.msra.mxu0 0.0
        %379 = vmatprep.subr.mxu0 0.0
        %380 = vmatpush1.msra.mxu0 0.0
        %381 = vmatprep.subr.mxu0 0.0
        %382 = vmatpush1.msra.mxu0 0.0
        %383 = vmatprep.subr.mxu0 0.0
        %384 = vmatpush1.msra.mxu0 0.0
        %385 = vmatprep.subr.mxu0 0.0
        %386 = vmatpush1.msra.mxu0 0.0
        %387 = vmatprep.subr.mxu0 0.0
        %388 = vmatpush1.msra.mxu0 0.0
        %389 = vmatprep.subr.mxu0 0.0
        %390 = vmatpush1.msra.mxu0 0.0
        %391 = vmatprep.subr.mxu0 0.0
        %392 = vmatpush1.msra.mxu0 0.0
        %393 = vmatprep.subr.mxu0 0.0
        %394 = vmatpush1.msra.mxu0 0.0
        %395 = vmatprep.subr.mxu0 0.0
        %396 = vmatpush1.msra.mxu0 0.0
        %397 = vmatprep.subr.mxu0 0.0
        %398 = vmatpush1.msra.mxu0 0.0
        %399 = vmatprep.subr.mxu0 0.0
        %400 = vmatpush1.msra.mxu0 0.0
        %401 = vmatprep.subr.mxu0 0.0
        %402 = vmatpush1.msra.mxu0 0.0
        %403 = vmatprep.subr.mxu0 0.0
        %404 = vmatpush1.msra.mxu0 0.0
        %405 = vmatprep.subr.mxu0 0.0
        %406 = vmatpush1.msra.mxu0 0.0
        %407 = vmatprep.subr.mxu0 0.0
        %408 = vmatpush1.msra.mxu0 0.0
        %409 = vmatprep.subr.mxu0 0.0
        %410 = vmatpush1.msra.mxu0 0.0
        %411 = vmatprep.subr.mxu0 0.0
        %412 = vmatpush1.msra.mxu0 0.0
        %413 = vmatprep.subr.mxu0 0.0
        %414 = vmatpush1.msra.mxu0 0.0
        %415 = vmatprep.subr.mxu0 0.0
        %416 = vmatpush1.msra.mxu0 0.0
        %417 = vmatprep.subr.mxu0 0.0
        %418 = vmatpush1.msra.mxu0 0.0
        %419 = vmatprep.subr.mxu0 0.0
        %420 = vmatpush1.msra.mxu0 0.0
        %421 = vmatprep.subr.mxu0 0.0
        %422 = vmatpush1.msra.mxu0 0.0
        %423 = vmatprep.subr.mxu0 0.0
        %424 = vmatpush1.msra.mxu0 0.0
        %425 = vmatprep.subr.mxu0 0.0
        %426 = vmatpush1.msra.mxu0 0.0
        %427 = vmatprep.subr.mxu0 0.0
        %428 = vmatpush1.msra.mxu0 0.0
        %429 = vmatprep.subr.mxu0 0.0
        %430 = vmatpush1.msra.mxu0 0.0
        %431 = vmatprep.subr.mxu0 0.0
        %432 = vmatpush1.msra.mxu0 0.0
        %433 = vmatprep.subr.mxu0 0.0
        %434 = vmatpush1.msra.mxu0 0.0
        %435 = vmatprep.mubr.f32.mxu0 0.0
        %436 = vmatmul.mubr.f32.gmra.mrb[0].mxu0 %v365
        %v437 = vpop.f32.mrb[0].mxu0
        %v438 = vadd.f32 %v361, %v437
        %v439 = vpop.f32.mrb[0].mxu0
        %440 = vdwg.mxu0
        %vm441 = vcmask 7168
        %442 = vst.msk [vmem:[%s250] sm:$0xff] %vm441, %v438
      $region48: #{ms_cam_forward.2} parent=39 // pred_fallthru
        _
      %p443 = scmp.lt.s32.totalorder %s20, 1
      %s444 = scalar_select %p443, %s20, 1
      %s445 = smul.addr %s444, 8
      %s446 = scalar_lea.vmem %s5, %s445
      // Predicated region
      $region49: #{ms_cam_forward.2} parent=39 // pred_check
        %p447 = pneg %p158
      $region50: #{ms_cam_forward.2} parent=39 // pred_check_branch
        %449 = sbr.rel (%p447) target = $region52
      $region51: #{ms_cam_forward.2} parent=39 // pred_region
        _
      $region52: #{ms_cam_forward.2} parent=39 // pred_fallthru
        _
    $region40: #{ms_cam_forward.2} parent=5 // pred_fallthru
      _
    %p450 = scmp.le.s32.totalorder 2, %s11
    // Predicated region
    $region53: #{ms_cam_forward.2} parent=5 // pred_check
      %p451 = pneg %p450
    $region54: #{ms_cam_forward.2} parent=5 // pred_check_branch
      %453 = sbr.rel (%p451) target = $region56
    $region55: #{ms_cam_forward.2} parent=5 // pred_region
      %s454 = ssub.s32 %s11, 2
      // Predicated region
      $region57: #{ms_cam_forward.2} parent=55 // pred_check
        %p455 = pneg %p164
      $region58: #{ms_cam_forward.2} parent=55 // pred_check_branch
        %457 = sbr.rel (%p455) target = $region60
      $region59: #{ms_cam_forward.2} parent=55 // pred_region
        %p458 = scmp.lt.s32.totalorder %s22, 1
        %s459 = scalar_select %p458, %s22, 1
        %s460 = smul.addr %s459, 8
        %s461 = scalar_lea.vmem %s5, %s460
      $region60: #{ms_cam_forward.2} parent=55 // pred_fallthru
        _
    $region56: #{ms_cam_forward.2} parent=5 // pred_fallthru
      _
  $region6: #{ms_cam_forward.2} parent=0 // loop_footer
    %s15 = sadd.s32 1, %s11
  $region7: #{ms_cam_forward.2} parent=0 // loop_footer_branch
    %10 = sbr.rel target = $region3
  $region8: #{ms_cam_forward.2} parent=0 // loop_exit
    _

// kernel: ms_cam_forward.3
$region0: #{ms_cam_forward.3}
  #allocation0 [shape = 'u32[]', space=smem, size = 0x4, offset = 0x4, fixed_abs, tag = 'smem constant byte address 0x4 - core index']
  #allocation1 [shape = 'u32[144,128]{1,0:T(1,128)}', space=vmem, size = 0x12000, scoped, tag = 'internal scratch']
  %s0 = inlined_call_operand.vmem [shape: f32[2,8,256], index: 0, kind: input, shape index: {}]
  %s1 = inlined_call_operand.vmem [shape: f32[2,8,1], index: 1, kind: input, shape index: {}]
  %s2 = inlined_call_operand.vmem [shape: f32[7,8], index: 2, kind: input, shape index: {}]
  %s3 = inlined_call_operand.vmem [shape: f32[7,1], index: 3, kind: input, shape index: {}]
  %s4 = inlined_call_operand.vmem [shape: f32[8,7], index: 4, kind: input, shape index: {}]
  %s5 = inlined_call_operand.vmem [shape: f32[2,8,256], index: 5, kind: output, shape index: {}]
  %s6 = sld [smem:[#allocation0]]
  $region53: #{ms_cam_forward.3} parent=0
    _
  %s8 = ssub.s32 1, %s6
  %s9 = scalar_select 0, %s8, %s6
  loop: start=0, step=1, limit=4
  $region2: #{ms_cam_forward.3} parent=0 // loop_pre_header
    _
  $region3: #{ms_cam_forward.3} parent=0 // loop_header
    %s11 = sphi 0, %s15
    %p12 = scmp.ge.s32.totalorder %s11, 4
    %s18 = sphi 0, %s30
    %s19 = sphi 0, %s26
    %s20 = sphi 0, %s18
    %s21 = sphi 0, %s19
    %s22 = sphi 0, %s20
    %s23 = sphi 0, %s21
    %s35 = sphi 0, %s37
    %s38 = sphi 0, %s35
    %s39 = sphi 0, %s38
    %s55 = sphi 0, %s39
    %s61 = sphi 0, %s63
    %s64 = sphi 0, %s61
    %s65 = sphi 0, %s64
    %s81 = sphi 0, %s65
    %s85 = sphi 0, %s85
    %s87 = sphi 0, %s85
    %s88 = sphi 0, %s87
    %s102 = sphi 0, %s88
    %s106 = sphi 0, %s106
    %s108 = sphi 0, %s106
    %s109 = sphi 0, %s108
    %s123 = sphi 0, %s109
    %s127 = sphi 0, %s127
    %s129 = sphi 0, %s127
    %s130 = sphi 0, %s129
    %s144 = sphi 0, %s130
    %s152 = sphi 0, %s154
    %s155 = sphi 0, %s152
    %s156 = sphi 0, %s155
    %s172 = sphi 0, %s156
  $region4: #{ms_cam_forward.3} parent=0 // loop_header_branch
    %14 = sbr.rel (%p12) target = $region8
  $region5: #{ms_cam_forward.3} parent=0 // loop_body
    %s16 = ssub.s32 %s11, 1
    %s17 = ssub.s32 %s11, 2
    %s24 = sadd.s32 1, %s19
    %p25 = scmp.ge.s32.totalorder %s24, 1
    %s26 = scalar_select %p25, 0, %s24
    %s27 = sadd.s32 1, %s18
    %s28 = scalar_select %p25, %s27, %s18
    %p29 = scmp.ge.s32.totalorder %s28, 2
    %s30 = scalar_select %p29, 0, %s28
    %s31 = ssub.s32 %s18, %s30
    %s32 = ssub.s32 %s19, %s26
    %s33 = sor.u32 %s31, %s32
    %p34 = scmp.eq.s32.totalorder %s33, 0
    %s36 = sadd.s32 %s35, 1
    %s37 = scalar_select %p34, %s35, %s36
    %p40 = pneg %p34
    %p41 = scmp.eq.s32.totalorder %s11, 1
    %p42 = por %p40, %p41
    %p43 = scmp.ne.s32.totalorder %s35, %s38
    %p44 = scmp.eq.s32.totalorder %s11, 0
    %p45 = por %p43, %p44
    %p46 = scmp.ne.s32.totalorder %s35, %s38
    %p47 = scmp.eq.s32.totalorder %s16, 1
    %p48 = por %p46, %p47
    %p49 = scmp.ne.s32.totalorder %s38, %s39
    %p50 = scmp.eq.s32.totalorder %s16, 0
    %p51 = por %p49, %p50
    %p52 = scmp.ne.s32.totalorder %s38, %s39
    %p53 = scmp.eq.s32.totalorder %s17, 1
    %p54 = por %p52, %p53
    %p56 = scmp.ne.s32.totalorder %s39, %s55
    %p57 = scmp.eq.s32.totalorder %s17, 0
    %p58 = por %p56, %p57
    %s59 = ssub.s32 %s18, %s30
    %p60 = scmp.eq.s32.totalorder %s59, 0
    %s62 = sadd.s32 %s61, 1
    %s63 = scalar_select %p60, %s61, %s62
    %p66 = pneg %p60
    %p67 = scmp.eq.s32.totalorder %s11, 1
    %p68 = por %p66, %p67
    %p69 = scmp.ne.s32.totalorder %s61, %s64
    %p70 = scmp.eq.s32.totalorder %s11, 0
    %p71 = por %p69, %p70
    %p72 = scmp.ne.s32.totalorder %s61, %s64
    %p73 = scmp.eq.s32.totalorder %s16, 1
    %p74 = por %p72, %p73
    %p75 = scmp.ne.s32.totalorder %s64, %s65
    %p76 = scmp.eq.s32.totalorder %s16, 0
    %p77 = por %p75, %p76
    %p78 = scmp.ne.s32.totalorder %s64, %s65
    %p79 = scmp.eq.s32.totalorder %s17, 1
    %p80 = por %p78, %p79
    %p82 = scmp.ne.s32.totalorder %s65, %s81
    %p83 = scmp.eq.s32.totalorder %s17, 0
    %p84 = por %p82, %p83
    %s86 = sadd.s32 %s85, 1
    %p89 = scmp.eq.s32.totalorder %s11, 1
    %p90 = scmp.ne.s32.totalorder %s85, %s87
    %p91 = scmp.eq.s32.totalorder %s11, 0
    %p92 = por %p90, %p91
    %p93 = scmp.ne.s32.totalorder %s85, %s87
    %p94 = scmp.eq.s32.totalorder %s16, 1
    %p95 = por %p93, %p94
    %p96 = scmp.ne.s32.totalorder %s87, %s88
    %p97 = scmp.eq.s32.totalorder %s16, 0
    %p98 = por %p96, %p97
    %p99 = scmp.ne.s32.totalorder %s87, %s88
    %p100 = scmp.eq.s32.totalorder %s17, 1
    %p101 = por %p99, %p100
    %p103 = scmp.ne.s32.totalorder %s88, %s102
    %p104 = scmp.eq.s32.totalorder %s17, 0
    %p105 = por %p103, %p104
    %s107 = sadd.s32 %s106, 1
    %p110 = scmp.eq.s32.totalorder %s11, 1
    %p111 = scmp.ne.s32.totalorder %s106, %s108
    %p112 = scmp.eq.s32.totalorder %s11, 0
    %p113 = por %p111, %p112
    %p114 = scmp.ne.s32.totalorder %s106, %s108
    %p115 = scmp.eq.s32.totalorder %s16, 1
    %p116 = por %p114, %p115
    %p117 = scmp.ne.s32.totalorder %s108, %s109
    %p118 = scmp.eq.s32.totalorder %s16, 0
    %p119 = por %p117, %p118
    %p120 = scmp.ne.s32.totalorder %s108, %s109
    %p121 = scmp.eq.s32.totalorder %s17, 1
    %p122 = por %p120, %p121
    %p124 = scmp.ne.s32.totalorder %s109, %s123
    %p125 = scmp.eq.s32.totalorder %s17, 0
    %p126 = por %p124, %p125
    %s128 = sadd.s32 %s127, 1
    %p131 = scmp.eq.s32.totalorder %s11, 1
    %p132 = scmp.ne.s32.totalorder %s127, %s129
    %p133 = scmp.eq.s32.totalorder %s11, 0
    %p134 = por %p132, %p133
    %p135 = scmp.ne.s32.totalorder %s127, %s129
    %p136 = scmp.eq.s32.totalorder %s16, 1
    %p137 = por %p135, %p136
    %p138 = scmp.ne.s32.totalorder %s129, %s130
    %p139 = scmp.eq.s32.totalorder %s16, 0
    %p140 = por %p138, %p139
    %p141 = scmp.ne.s32.totalorder %s129, %s130
    %p142 = scmp.eq.s32.totalorder %s17, 1
    %p143 = por %p141, %p142
    %p145 = scmp.ne.s32.totalorder %s130, %s144
    %p146 = scmp.eq.s32.totalorder %s17, 0
    %p147 = por %p145, %p146
    %s148 = ssub.s32 %s18, %s30
    %s149 = ssub.s32 %s19, %s26
    %s150 = sor.u32 %s148, %s149
    %p151 = scmp.eq.s32.totalorder %s150, 0
    %s153 = sadd.s32 %s152, 1
    %s154 = scalar_select %p151, %s152, %s153
    %p157 = pneg %p151
    %p158 = scmp.eq.s32.totalorder %s11, 1
    %p159 = por %p157, %p158
    %p160 = scmp.ne.s32.totalorder %s152, %s155
    %p161 = scmp.eq.s32.totalorder %s11, 0
    %p162 = por %p160, %p161
    %p163 = scmp.ne.s32.totalorder %s152, %s155
    %p164 = scmp.eq.s32.totalorder %s16, 1
    %p165 = por %p163, %p164
    %p166 = scmp.ne.s32.totalorder %s155, %s156
    %p167 = scmp.eq.s32.totalorder %s16, 0
    %p168 = por %p166, %p167
    %p169 = scmp.ne.s32.totalorder %s155, %s156
    %p170 = scmp.eq.s32.totalorder %s17, 1
    %p171 = por %p169, %p170
    %p173 = scmp.ne.s32.totalorder %s156, %s172
    %p174 = scmp.eq.s32.totalorder %s17, 0
    %p175 = por %p173, %p174
    %p176 = scmp.le.s32.totalorder 1, %s11
    %p177 = scmp.lt.s32.totalorder %s11, 3
    %p178 = pnand %p176, %p177
    %p179 = pneg %p178
    // Predicated region
    $region9: #{ms_cam_forward.3} parent=5 // pred_check
      _
    $region10: #{ms_cam_forward.3} parent=5 // pred_check_branch
      %181 = sbr.rel (%p178) target = $region12
    $region11: #{ms_cam_forward.3} parent=5 // pred_region
      %s182 = ssub.s32 %s11, 1
      // Predicated region
      $region13: #{ms_cam_forward.3} parent=11 // pred_check
        %p183 = pneg %p98
      $region14: #{ms_cam_forward.3} parent=11 // pred_check_branch
        %185 = sbr.rel (%p183) target = $region16
      $region15: #{ms_cam_forward.3} parent=11 // pred_region
        _
      $region16: #{ms_cam_forward.3} parent=11 // pred_fallthru
        _
      // Predicated region
      $region17: #{ms_cam_forward.3} parent=11 // pred_check
        %p186 = pneg %p119
      $region18: #{ms_cam_forward.3} parent=11 // pred_check_branch
        %188 = sbr.rel (%p186) target = $region20
      $region19: #{ms_cam_forward.3} parent=11 // pred_region
        _
      $region20: #{ms_cam_forward.3} parent=11 // pred_fallthru
        _
      // Predicated region
      $region21: #{ms_cam_forward.3} parent=11 // pred_check
        %p189 = pneg %p140
      $region22: #{ms_cam_forward.3} parent=11 // pred_check_branch
        %191 = sbr.rel (%p189) target = $region24
      $region23: #{ms_cam_forward.3} parent=11 // pred_region
        _
      $region24: #{ms_cam_forward.3} parent=11 // pred_fallthru
        _
    $region12: #{ms_cam_forward.3} parent=5 // pred_fallthru
      _
    %p192 = scmp.lt.s32.totalorder %s11, 2
    // Predicated region
    $region25: #{ms_cam_forward.3} parent=5 // pred_check
      %p193 = pneg %p192
    $region26: #{ms_cam_forward.3} parent=5 // pred_check_branch
      %195 = sbr.rel (%p193) target = $region28
    $region27: #{ms_cam_forward.3} parent=5 // pred_region
      // Predicated region
      $region29: #{ms_cam_forward.3} parent=27 // pred_check
        %p196 = pneg %p45
      $region30: #{ms_cam_forward.3} parent=27 // pred_check_branch
        %198 = sbr.rel (%p196) target = $region32
      $region31: #{ms_cam_forward.3} parent=27 // pred_region
        %s199 = smul.u32 2, %s19
        %p200 = scmp.lt.s32.totalorder %s18, 1
        %s201 = scalar_select %p200, %s18, 1
        %p202 = scmp.lt.s32.totalorder %s199, 1
        %s203 = scalar_select %p202, %s199, 1
        %s204 = smul.addr %s201, 2
        %s205 = sadd.s32 %s203, %s204
        %s206 = smul.addr %s205, 8
        %s207 = scalar_lea.vmem %s0, %s206
        %s208 = smul.u32 2, %s19
      $region32: #{ms_cam_forward.3} parent=27 // pred_fallthru
        _
      // Predicated region
      $region33: #{ms_cam_forward.3} parent=27 // pred_check
        %p209 = pneg %p71
      $region34: #{ms_cam_forward.3} parent=27 // pred_check_branch
        %211 = sbr.rel (%p209) target = $region36
      $region35: #{ms_cam_forward.3} parent=27 // pred_region
        %p212 = scmp.lt.s32.totalorder %s18, 1
        %s213 = scalar_select %p212, %s18, 1
        %s214 = smul.addr %s213, 8
        %s215 = scalar_lea.vmem %s1, %s214
      $region36: #{ms_cam_forward.3} parent=27 // pred_fallthru
        _
    $region28: #{ms_cam_forward.3} parent=5 // pred_fallthru
      _
    %p216 = scmp.le.s32.totalorder 1, %s11
    %p217 = scmp.lt.s32.totalorder %s11, 3
    %p218 = pnand %p216, %p217
    %p219 = pneg %p218
    // Predicated region
    $region37: #{ms_cam_forward.3} parent=5 // pred_check
      _
    $region38: #{ms_cam_forward.3} parent=5 // pred_check_branch
      %221 = sbr.rel (%p218) target = $region40
    $region39: #{ms_cam_forward.3} parent=5 // pred_region
      %s222 = ssub.s32 %s11, 1
      %s223 = smul.u32 2, %s21
      %p224 = scmp.lt.s32.totalorder %s20, 1
      %s225 = scalar_select %p224, %s20, 1
      %p226 = scmp.lt.s32.totalorder %s223, 1
      %s227 = scalar_select %p226, %s223, 1
      %s228 = smul.addr %s225, 2
      %s229 = sadd.s32 %s227, %s228
      %s230 = smul.addr %s229, 8
      %s231 = scalar_lea.vmem %s0, %s230
      %p232 = pneg %p51
      %p233 = pneg %p48
      %p234 = scmp.lt.s32.totalorder %s20, 1
      %s235 = scalar_select %p234, %s20, 1
      %s236 = smul.addr %s235, 8
      %s237 = scalar_lea.vmem %s1, %s236
      %p238 = pneg %p77
      %p239 = pneg %p74
      %p240 = pneg %p98
      %p241 = pneg %p95
      %p242 = pneg %p119
      %p243 = pneg %p116
      %p244 = pneg %p140
      %p245 = pneg %p137
      %p246 = pneg %p168
      %p247 = pneg %p165
      %s248 = smul.u32 2, %s21
      %p249 = scmp.lt.s32.totalorder %s20, 1
      %s250 = scalar_select %p249, %s20, 1
      %p251 = scmp.lt.s32.totalorder %s248, 1
      %s252 = scalar_select %p251, %s248, 1
      %s253 = smul.addr %s250, 2
      %s254 = sadd.s32 %s252, %s253
      %s255 = smul.addr %s254, 8
      %s256 = scalar_lea.vmem %s5, %s255
      %s257 = smul.u32 2, %s21
      %p258 = scmp.lt.s32.totalorder %s20, 1
      %s259 = scalar_select %p258, %s20, 1
      %p260 = scmp.lt.s32.totalorder %s257, 1
      %s261 = scalar_select %p260, %s257, 1
      %s262 = smul.addr %s259, 2
      %s263 = sadd.s32 %s261, %s262
      %s264 = smul.addr %s263, 8
      %s265 = scalar_lea.vmem %s0, %s264
      %s266 = smul.u32 2, %s21
      %p267 = scmp.lt.s32.totalorder %s20, 1
      %s268 = scalar_select %p267, %s20, 1
      %s269 = smul.addr %s268, 8
      %s270 = scalar_lea.vmem %s1, %s269
      %s271 = smul.u32 2, %s21
      %p272 = scmp.lt.s32.totalorder %s20, 1
      %s273 = scalar_select %p272, %s20, 1
      %p274 = scmp.lt.s32.totalorder %s271, 1
      %s275 = scalar_select %p274, %s271, 1
      %s276 = smul.addr %s273, 2
      %s277 = sadd.s32 %s275, %s276
      %s278 = smul.addr %s277, 8
      %s279 = scalar_lea.vmem %s5, %s278
      %s280 = smul.u32 2, %s21
      %v281 = vld [vmem:[%s265] sm:$0xff]
      %v282 = vld [vmem:[%s265 + $0x8] sm:$0xff]
      %v283 = vld [vmem:[%s2] sm:$0x7f]
      %v284 = vld [vmem:[%s3] sm:$0x7f]
      %286 = vset.pattern.permute.xlu0 0
      %287 = vperm.xlu0 %286, %v284
      %v288 = vpop.permute.xlu0 %287
      %vm290 = vcmask 64512
      %v292 = vsel %vm290, %v283, 0
      %294 = vmatprep.subr.mxu0 %v282
      %295 = vmatpush1.msra.mxu0 %v281
      %296 = vmatprep.subr.mxu0 0.0
      %297 = vmatpush1.msra.mxu0 0.0
      %298 = vmatprep.subr.mxu0 0.0
      %299 = vmatpush1.msra.mxu0 0.0
      %300 = vmatprep.subr.mxu0 0.0
      %301 = vmatpush1.msra.mxu0 0.0
      %302 = vmatprep.subr.mxu0 0.0
      %303 = vmatpush1.msra.mxu0 0.0
      %304 = vmatprep.subr.mxu0 0.0
      %305 = vmatpush1.msra.mxu0 0.0
      %306 = vmatprep.subr.mxu0 0.0
      %307 = vmatpush1.msra.mxu0 0.0
      %308 = vmatprep.subr.mxu0 0.0
      %309 = vmatpush1.msra.mxu0 0.0
      %310 = vmatprep.subr.mxu0 0.0
      %311 = vmatpush1.msra.mxu0 0.0
      %312 = vmatprep.subr.mxu0 0.0
      %313 = vmatpush1.msra.mxu0 0.0
      %314 = vmatprep.subr.mxu0 0.0
      %315 = vmatpush1.msra.mxu0 0.0
      %316 = vmatprep.subr.mxu0 0.0
      %317 = vmatpush1.msra.mxu0 0.0
      %318 = vmatprep.subr.mxu0 0.0
      %319 = vmatpush1.msra.mxu0 0.0
      %320 = vmatprep.subr.mxu0 0.0
      %321 = vmatpush1.msra.mxu0 0.0
      %322 = vmatprep.subr.mxu0 0.0
      %323 = vmatpush1.msra.mxu0 0.0
      %324 = vmatprep.subr.mxu0 0.0
      %325 = vmatpush1.msra.mxu0 0.0
      %326 = vmatprep.subr.mxu0 0.0
      %327 = vmatpush1.msra.mxu0 0.0
      %328 = vmatprep.subr.mxu0 0.0
      %329 = vmatpush1.msra.mxu0 0.0
      %330 = vmatprep.subr.mxu0 0.0
      %331 = vmatpush1.msra.mxu0 0.0
      %332 = vmatprep.subr.mxu0 0.0
      %333 = vmatpush1.msra.mxu0 0.0
      %334 = vmatprep.subr.mxu0 0.0
      %335 = vmatpush1.msra.mxu0 0.0
      %336 = vmatprep.subr.mxu0 0.0
      %337 = vmatpush1.msra.mxu0 0.0
      %338 = vmatprep.subr.mxu0 0.0
      %339 = vmatpush1.msra.mxu0 0.0
      %340 = vmatprep.subr.mxu0 0.0
      %341 = vmatpush1.msra.mxu0 0.0
      %342 = vmatprep.subr.mxu0 0.0
      %343 = vmatpush1.msra.mxu0 0.0
      %344 = vmatprep.subr.mxu0 0.0
      %345 = vmatpush1.msra.mxu0 0.0
      %346 = vmatprep.subr.mxu0 0.0
      %347 = vmatpush1.msra.mxu0 0.0
      %348 = vmatprep.subr.mxu0 0.0
      %349 = vmatpush1.msra.mxu0 0.0
      %350 = vmatprep.subr.mxu0 0.0
      %351 = vmatpush1.msra.mxu0 0.0
      %352 = vmatprep.subr.mxu0 0.0
      %353 = vmatpush1.msra.mxu0 0.0
      %354 = vmatprep.subr.mxu0 0.0
      %355 = vmatpush1.msra.mxu0 0.0
      %356 = vmatprep.subr.mxu0 0.0
      %357 = vmatpush1.msra.mxu0 0.0
      %358 = vmatprep.mubr.f32.mxu0 0.0
      %359 = vmatmul.mubr.f32.gmra.mrb[0].mxu0 %v292
      %v360 = vpop.f32.mrb[0].mxu0
      %v361 = vadd.f32 %v288, %v360
      %v362 = vpop.f32.mrb[0].mxu0
      %v363 = vadd.f32 %v288, %v362
      %364 = vdwg.mxu0
      %v365 = vmax.f32 %v361, 0.0
      %v366 = vmax.f32 %v363, 0.0
      %v367 = vld [vmem:[%s4] sm:$0xff]
      %v368 = vld [vmem:[%s270] sm:$0xff]
      %370 = vset.pattern.permute.xlu0 0
      %371 = vperm.xlu0 %370, %v368
      %v372 = vpop.permute.xlu0 %371
      %vm374 = vcmask 56320
      %v376 = vsel %vm374, %v367, 0
      %vm378 = vcmask 1046528
      %v380 = vsel %vm378, %v365, 0
      %v383 = vsel %vm378, %v366, 0
      %385 = vmatprep.subr.mxu0 %v383
      %386 = vmatpush1.msra.mxu0 %v380
      %387 = vmatprep.subr.mxu0 0.0
      %388 = vmatpush1.msra.mxu0 0.0
      %389 = vmatprep.subr.mxu0 0.0
      %390 = vmatpush1.msra.mxu0 0.0
      %391 = vmatprep.subr.mxu0 0.0
      %392 = vmatpush1.msra.mxu0 0.0
      %393 = vmatprep.subr.mxu0 0.0
      %394 = vmatpush1.msra.mxu0 0.0
      %395 = vmatprep.subr.mxu0 0.0
      %396 = vmatpush1.msra.mxu0 0.0
      %397 = vmatprep.subr.mxu0 0.0
      %398 = vmatpush1.msra.mxu0 0.0
      %399 = vmatprep.subr.mxu0 0.0
      %400 = vmatpush1.msra.mxu0 0.0
      %401 = vmatprep.subr.mxu0 0.0
      %402 = vmatpush1.msra.mxu0 0.0
      %403 = vmatprep.subr.mxu0 0.0
      %404 = vmatpush1.msra.mxu0 0.0
      %405 = vmatprep.subr.mxu0 0.0
      %406 = vmatpush1.msra.mxu0 0.0
      %407 = vmatprep.subr.mxu0 0.0
      %408 = vmatpush1.msra.mxu0 0.0
      %409 = vmatprep.subr.mxu0 0.0
      %410 = vmatpush1.msra.mxu0 0.0
      %411 = vmatprep.subr.mxu0 0.0
      %412 = vmatpush1.msra.mxu0 0.0
      %413 = vmatprep.subr.mxu0 0.0
      %414 = vmatpush1.msra.mxu0 0.0
      %415 = vmatprep.subr.mxu0 0.0
      %416 = vmatpush1.msra.mxu0 0.0
      %417 = vmatprep.subr.mxu0 0.0
      %418 = vmatpush1.msra.mxu0 0.0
      %419 = vmatprep.subr.mxu0 0.0
      %420 = vmatpush1.msra.mxu0 0.0
      %421 = vmatprep.subr.mxu0 0.0
      %422 = vmatpush1.msra.mxu0 0.0
      %423 = vmatprep.subr.mxu0 0.0
      %424 = vmatpush1.msra.mxu0 0.0
      %425 = vmatprep.subr.mxu0 0.0
      %426 = vmatpush1.msra.mxu0 0.0
      %427 = vmatprep.subr.mxu0 0.0
      %428 = vmatpush1.msra.mxu0 0.0
      %429 = vmatprep.subr.mxu0 0.0
      %430 = vmatpush1.msra.mxu0 0.0
      %431 = vmatprep.subr.mxu0 0.0
      %432 = vmatpush1.msra.mxu0 0.0
      %433 = vmatprep.subr.mxu0 0.0
      %434 = vmatpush1.msra.mxu0 0.0
      %435 = vmatprep.subr.mxu0 0.0
      %436 = vmatpush1.msra.mxu0 0.0
      %437 = vmatprep.subr.mxu0 0.0
      %438 = vmatpush1.msra.mxu0 0.0
      %439 = vmatprep.subr.mxu0 0.0
      %440 = vmatpush1.msra.mxu0 0.0
      %441 = vmatprep.subr.mxu0 0.0
      %442 = vmatpush1.msra.mxu0 0.0
      %443 = vmatprep.subr.mxu0 0.0
      %444 = vmatpush1.msra.mxu0 0.0
      %445 = vmatprep.subr.mxu0 0.0
      %446 = vmatpush1.msra.mxu0 0.0
      %447 = vmatprep.subr.mxu0 0.0
      %448 = vmatpush1.msra.mxu0 0.0
      %449 = vmatprep.mubr.f32.mxu0 0.0
      %450 = vmatmul.mubr.f32.gmra.mrb[0].mxu0 %v376
      %v451 = vpop.f32.mrb[0].mxu0
      %v452 = vadd.f32 %v372, %v451
      %v453 = vpop.f32.mrb[0].mxu0
      %v454 = vadd.f32 %v372, %v453
      %455 = vdwg.mxu0
      %v456 = vxor.u32 %v452, 2147483648
      %v457 = vxor.u32 %v454, 2147483648
      %v458 = vmul.f32 %v456, 1.442695
      %v459 = vpow.pop %v458
      %v460 = vmul.f32 %v457, 1.442695
      %v461 = vpow.pop %v460
      %v462 = vadd.f32 %v459, 1.0
      %v463 = vadd.f32 %v461, 1.0
      %v464 = vrcp.pop %v462
      %v465 = vmul.f32 1.0, %v464
      %v466 = vrcp.pop %v463
      %v467 = vmul.f32 1.0, %v466
      %v468 = vmul.f32 %v281, %v465
      %v469 = vmul.f32 %v282, %v467
      %470 = vst [vmem:[%s279] sm:$0xff] %v468
      %471 = vst [vmem:[%s279 + $0x8] sm:$0xff] %v469
      %s472 = smul.u32 2, %s21
      %p473 = scmp.lt.s32.totalorder %s20, 1
      %s474 = scalar_select %p473, %s20, 1
      %p475 = scmp.lt.s32.totalorder %s472, 1
      %s476 = scalar_select %p475, %s472, 1
      %s477 = smul.addr %s474, 2
      %s478 = sadd.s32 %s476, %s477
      %s479 = smul.addr %s478, 8
      %s480 = scalar_lea.vmem %s5, %s479
      // Predicated region
      $region41: #{ms_cam_forward.3} parent=39 // pred_check
        %p481 = pneg %p165
      $region42: #{ms_cam_forward.3} parent=39 // pred_check_branch
        %483 = sbr.rel (%p481) target = $region44
      $region43: #{ms_cam_forward.3} parent=39 // pred_region
        %s484 = smul.u32 2, %s21
      $region44: #{ms_cam_forward.3} parent=39 // pred_fallthru
        _
    $region40: #{ms_cam_forward.3} parent=5 // pred_fallthru
      _
    %p485 = scmp.le.s32.totalorder 2, %s11
    // Predicated region
    $region45: #{ms_cam_forward.3} parent=5 // pred_check
      %p486 = pneg %p485
    $region46: #{ms_cam_forward.3} parent=5 // pred_check_branch
      %488 = sbr.rel (%p486) target = $region48
    $region47: #{ms_cam_forward.3} parent=5 // pred_region
      %s489 = ssub.s32 %s11, 2
      // Predicated region
      $region49: #{ms_cam_forward.3} parent=47 // pred_check
        %p490 = pneg %p171
      $region50: #{ms_cam_forward.3} parent=47 // pred_check_branch
        %492 = sbr.rel (%p490) target = $region52
      $region51: #{ms_cam_forward.3} parent=47 // pred_region
        %s493 = smul.u32 2, %s23
        %p494 = scmp.lt.s32.totalorder %s22, 1
        %s495 = scalar_select %p494, %s22, 1
        %p496 = scmp.lt.s32.totalorder %s493, 1
        %s497 = scalar_select %p496, %s493, 1
        %s498 = smul.addr %s495, 2
        %s499 = sadd.s32 %s497, %s498
        %s500 = smul.addr %s499, 8
        %s501 = scalar_lea.vmem %s5, %s500
      $region52: #{ms_cam_forward.3} parent=47 // pred_fallthru
        _
    $region48: #{ms_cam_forward.3} parent=5 // pred_fallthru
      _
  $region6: #{ms_cam_forward.3} parent=0 // loop_footer
    %s15 = sadd.s32 1, %s11
  $region7: #{ms_cam_forward.3} parent=0 // loop_footer_branch
    %10 = sbr.rel target = $region3
  $region8: #{ms_cam_forward.3} parent=0 // loop_exit
    _

</llo_original>
